<compile_context>
chip_gen: v7x
topology: tpu7x:2x2x1
jax: 0.10.0
libtpu: 0.0.40
codegen_flags: <defaults>
</compile_context>

<pallas_src>
import functools

import jax
import jax.numpy as jnp
from jax.experimental import pallas as pl
from jax.experimental.pallas import tpu as pltpu

BN_EPS = 1e-5
_LANE = 128
_SUBLANE = 8
_VMEM_LIMIT = 48 * 1024 * 1024          # explicit scoped-VMEM cap (< v7x 64 MiB physical)
_FUSED_VMEM_BUDGET = 24 * 1024 * 1024   # conservative residency budget for the fused path


def _round_up(a, b):
    return (a + b - 1) // b * b


def _round_down(a, b):
    return a // b * b


def _pick_tile_n(n, in_dim, hidden, out_cols, *, target_x_bytes=1 << 20,
                 vmem_budget=20 << 20):
    """Aim for >= ~1 MiB of x per grid step (amortizes ~0.35us/step overhead),
    capped so double-buffered x/out tiles + h intermediates fit the VMEM budget."""
    per_row = 2 * in_dim * 4 + 2 * out_cols * 4 + 6 * hidden * 4
    tile = max(target_x_bytes // (in_dim * 4), _SUBLANE)
    tile = min(tile, max(vmem_budget // per_row, _SUBLANE))
    tile = min(tile, _round_up(n, _SUBLANE))
    return max(_SUBLANE, _round_down(tile, _SUBLANE))


# ------------------------------ fused single kernel ------------------------------
def _fused_kernel(x_ref, w1_ref, w2_ref, gamma_ref, beta_ref, o_ref,
                  h_scr, sum_scr, *, n_valid, rows_pad):
    i = pl.program_id(0)
    tile_n = x_ref.shape[0]

    @pl.when(i == 0)
    def _():
        sum_scr[...] = jnp.zeros_like(sum_scr)

    # Cast the x tile to bf16 in-kernel (free VPU work under the DMA); MXU accumulates f32.
    h = jnp.dot(x_ref[...].astype(jnp.bfloat16), w1_ref[...],
                preferred_element_type=jnp.float32)            # (tile_n, hidden) f32

    # Ragged last tile: rows past the true batch read undefined data -> zero them so
    # they contribute nothing to the batch statistics.  (n_valid is a static int.)
    if n_valid % tile_n != 0:
        row = i * tile_n + jax.lax.broadcasted_iota(jnp.int32, (tile_n, 1), 0)
        h = jnp.where(row < n_valid, h, 0.0)

    row0 = pl.multiple_of(i * tile_n, _SUBLANE)
    h_scr[pl.ds(row0, tile_n), :] = h                          # keep h resident in VMEM
    sum_scr[...] += jnp.sum(h, axis=0, keepdims=True)

    @pl.when(i == pl.num_programs(0) - 1)
    def _():
        inv_n = 1.0 / float(n_valid)
        mean = sum_scr[...] * inv_n                            # (1, hidden)
        hs = h_scr[...]                                        # (rows_pad, hidden); padded rows are 0
        centered = hs - mean
        css = jnp.sum(centered * centered, axis=0, keepdims=True)
        # Each zeroed padding row contributed exactly mean^2 to css; remove it.
        pad_rows = float(rows_pad - n_valid)
        var = jnp.maximum((css - pad_rows * mean * mean) * inv_n, 0.0)
        scale = gamma_ref[...] * jax.lax.rsqrt(var + BN_EPS)   # folded BatchNorm
        shift = beta_ref[...] - mean * scale
        hn = jnp.maximum(hs * scale + shift, 0.0)              # scale/shift + ReLU
        o_ref[...] = jnp.dot(hn.astype(jnp.bfloat16), w2_ref[...],
                             preferred_element_type=jnp.float32)


def _fused_forward(x, w1_t, w2_t, gamma2d, beta2d, *, tile_n, n):
    in_dim = x.shape[1]
    hidden = w1_t.shape[1]
    out_cols = w2_t.shape[1]
    n_tiles = pl.cdiv(n, tile_n)
    rows_pad = n_tiles * tile_n

    kernel = functools.partial(_fused_kernel, n_valid=n, rows_pad=rows_pad)
    return pl.pallas_call(
        kernel,
        out_shape=jax.ShapeDtypeStruct((rows_pad, out_cols), jnp.float32),
        grid=(n_tiles,),
        in_specs=[
            pl.BlockSpec((tile_n, in_dim), lambda i: (i, 0)),      # x (f32; cast in kernel)
            pl.BlockSpec((in_dim, hidden), lambda i: (0, 0)),      # W1^T (bf16)
            pl.BlockSpec((hidden, out_cols), lambda i: (0, 0)),    # W2^T, lane-padded (bf16)
            pl.BlockSpec((1, hidden), lambda i: (0, 0)),           # gamma
            pl.BlockSpec((1, hidden), lambda i: (0, 0)),           # beta
        ],
        # Constant block index -> output resident in VMEM across the whole grid,
        # written back to HBM once after the final (epilogue) step.
        out_specs=pl.BlockSpec((rows_pad, out_cols), lambda i: (0, 0)),
        scratch_shapes=[pltpu.VMEM((rows_pad, hidden), jnp.float32),   # resident h
                        pltpu.VMEM((1, hidden), jnp.float32)],         # running sum(h)
        compiler_params=pltpu.CompilerParams(
            dimension_semantics=("arbitrary",),   # sequential: stats accumulate across tiles
            vmem_limit_bytes=_VMEM_LIMIT),
    )(x, w1_t, w2_t, gamma2d, beta2d)


# ----------------- two-phase fallback (h too large to keep resident) -----------------
def _stats_kernel(x_ref, w1_ref, k_ref, s1_ref, s2_ref, *, n_valid):
    i = pl.program_id(0)
    tile_n = x_ref.shape[0]

    h = jnp.dot(x_ref[...].astype(jnp.bfloat16), w1_ref[...],
                preferred_element_type=jnp.float32)

    ragged = (n_valid % tile_n) != 0
    if ragged:
        row = i * tile_n + jax.lax.broadcasted_iota(jnp.int32, (tile_n, 1), 0)
        valid = row < n_valid
        h = jnp.where(valid, h, 0.0)

    @pl.when(i == 0)
    def _():
        # Per-feature shift (~= mean) from the first tile makes this a *shifted*
        # variance accumulation, avoiding E[h^2]-E[h]^2 cancellation.
        denom = float(min(tile_n, n_valid))
        k_ref[...] = jnp.sum(h, axis=0, keepdims=True) / denom
        s1_ref[...] = jnp.zeros_like(s1_ref)
        s2_ref[...] = jnp.zeros_like(s2_ref)

    d = h - k_ref[...]
    if ragged:
        d = jnp.where(valid, d, 0.0)
    s1_ref[...] += jnp.sum(d, axis=0, keepdims=True)
    s2_ref[...] += jnp.sum(d * d, axis=0, keepdims=True)


def _apply_kernel(x_ref, w1_ref, w2_ref, scale_ref, shift_ref, o_ref):
    h = jnp.dot(x_ref[...].astype(jnp.bfloat16), w1_ref[...],
                preferred_element_type=jnp.float32)
    h = jnp.maximum(h * scale_ref[...] + shift_ref[...], 0.0)    # folded BN + ReLU
    o_ref[...] = jnp.dot(h.astype(jnp.bfloat16), w2_ref[...],
                         preferred_element_type=jnp.float32)


def _two_phase_forward(x, w1_t, w2_t, gamma2d, beta2d, *, tile_n, n):
    in_dim = x.shape[1]
    hidden = w1_t.shape[1]
    out_cols = w2_t.shape[1]
    n_tiles = pl.cdiv(n, tile_n)

    k, s1, s2 = pl.pallas_call(
        functools.partial(_stats_kernel, n_valid=n),
        out_shape=(jax.ShapeDtypeStruct((1, hidden), jnp.float32),) * 3,
        grid=(n_tiles,),
        in_specs=[pl.BlockSpec((tile_n, in_dim), lambda i: (i, 0)),
                  pl.BlockSpec((in_dim, hidden), lambda i: (0, 0))],
        out_specs=(pl.BlockSpec((1, hidden), lambda i: (0, 0)),) * 3,
        compiler_params=pltpu.CompilerParams(
            dimension_semantics=("arbitrary",),
            vmem_limit_bytes=_VMEM_LIMIT),
    )(x, w1_t)

    inv_n = 1.0 / float(n)
    mean = k + s1 * inv_n
    var = jnp.maximum((s2 - s1 * s1 * inv_n) * inv_n, 0.0)
    scale = gamma2d * jax.lax.rsqrt(var + BN_EPS)
    shift = beta2d - mean * scale

    return pl.pallas_call(
        _apply_kernel,
        out_shape=jax.ShapeDtypeStruct((n, out_cols), jnp.float32),
        grid=(n_tiles,),
        in_specs=[pl.BlockSpec((tile_n, in_dim), lambda i: (i, 0)),
                  pl.BlockSpec((in_dim, hidden), lambda i: (0, 0)),
                  pl.BlockSpec((hidden, out_cols), lambda i: (0, 0)),
                  pl.BlockSpec((1, hidden), lambda i: (0, 0)),
                  pl.BlockSpec((1, hidden), lambda i: (0, 0))],
        out_specs=pl.BlockSpec((tile_n, out_cols), lambda i: (i, 0)),
        compiler_params=pltpu.CompilerParams(
            dimension_semantics=("parallel",),      # independent N tiles (megacore)
            vmem_limit_bytes=_VMEM_LIMIT),
    )(x, w1_t, w2_t, scale, shift)


# ----------------------------------- wrapper -----------------------------------
def mlp_forward(x, w1, w2, gamma, beta, *, tile_n=None, force_two_phase=False):
    """relu(BatchNorm1d(x @ W1^T, batch stats)) @ W2^T  (PyTorch MLP.forward)."""
    n, in_dim = x.shape
    hidden, in_dim_w = w1.shape
    out_dim, hidden_w = w2.shape
    assert in_dim_w == in_dim and hidden_w == hidden

    x = x.astype(jnp.float32)
    # Pre-transposed bf16 weights (MXU contraction layout).  W2^T is zero-padded to a
    # 128-column multiple so output stores are lane-dense; sliced back after the call.
    out_cols = _round_up(out_dim, _LANE)
    w1_t = w1.T.astype(jnp.bfloat16)                                    # (in_dim, hidden)
    w2_t = jnp.zeros((hidden, out_cols), jnp.bfloat16).at[:, :out_dim].set(
        w2.T.astype(jnp.bfloat16))                                      # (hidden, out_cols)
    gamma2d = gamma.reshape(1, hidden).astype(jnp.float32)
    beta2d = beta.reshape(1, hidden).astype(jnp.float32)

    if tile_n is None:
        tile_n = _pick_tile_n(n, in_dim, hidden, out_cols)
    tile_n = max(_SUBLANE, _round_up(min(tile_n, _round_up(n, _SUBLANE)), _SUBLANE))

    rows_pad = pl.cdiv(n, tile_n) * tile_n
    fused_bytes = (rows_pad * hidden * 4 * 5        # resident h + epilogue temporaries
                   + rows_pad * out_cols * 4        # resident output block
                   + 2 * tile_n * in_dim * 4)       # double-buffered x tiles
    use_fused = (not force_two_phase) and fused_bytes <= _FUSED_VMEM_BUDGET

    if use_fused:
        out = _fused_forward(x, w1_t, w2_t, gamma2d, beta2d, tile_n=tile_n, n=n)
    else:
        out = _two_phase_forward(x, w1_t, w2_t, gamma2d, beta2d, tile_n=tile_n, n=n)
    return out[:n, :out_dim]


# ----------------------------- references (pure JAX) ------------------------------
def reference_forward_bf16(x, w1, w2, gamma, beta):
    """Same numeric recipe as the kernels (bf16 matmul inputs, f32 accumulation)."""
    h = jnp.dot(x.astype(jnp.bfloat16), w1.T.astype(jnp.bfloat16),
                preferred_element_type=jnp.float32)
    mean = h.mean(axis=0, keepdims=True)
    var = ((h - mean) ** 2).mean(axis=0, keepdims=True)
    scale = gamma[None, :] * jax.lax.rsqrt(var + BN_EPS)
    shift = beta[None, :] - mean * scale
    h = jnp.maximum(h * scale + shift, 0.0)
    return jnp.dot(h.astype(jnp.bfloat16), w2.T.astype(jnp.bfloat16),
                   preferred_element_type=jnp.float32)


def reference_forward_f32(x, w1, w2, gamma, beta):
    """Full-precision forward matching the PyTorch module semantics."""
    h = x @ w1.T
    mean = h.mean(axis=0, keepdims=True)
    var = ((h - mean) ** 2).mean(axis=0, keepdims=True)
    h = (h - mean) / jnp.sqrt(var + BN_EPS) * gamma[None, :] + beta[None, :]
    h = jnp.maximum(h, 0.0)
    return h @ w2.T


# TODO(synk): BatchNorm1d's training-mode running_mean/running_var buffer updates are a
# module side effect not represented here; the forward output does not depend on them.

if __name__ == "__main__":
    input_dim, hidden_dim, output_dim = 16, 32, 8
    batch = 100                       # deliberately NOT a multiple of the tile size

    key = jax.random.PRNGKey(0)
    kx, k1, k2 = jax.random.split(key, 3)

    # PyTorch-style uniform(-1/sqrt(fan_in), 1/sqrt(fan_in)) init
    b1 = 1.0 / jnp.sqrt(input_dim)
    b2 = 1.0 / jnp.sqrt(hidden_dim)
    w1 = jax.random.uniform(k1, (hidden_dim, input_dim), jnp.float32, -b1, b1)
    w2 = jax.random.uniform(k2, (output_dim, hidden_dim), jnp.float32, -b2, b2)
    gamma = jnp.ones((hidden_dim,), jnp.float32)   # BatchNorm1d weight
    beta = jnp.zeros((hidden_dim,), jnp.float32)   # BatchNorm1d bias

    x = jax.random.normal(kx, (batch, input_dim), jnp.float32)

    ref_bf16 = reference_forward_bf16(x, w1, w2, gamma, beta)
    ref_f32 = reference_forward_f32(x, w1, w2, gamma, beta)

    def check(out, name):
        assert out.shape == (batch, output_dim), (name, out.shape)
        err_bf = float(jnp.max(jnp.abs(out - ref_bf16)))
        err_f32 = float(jnp.max(jnp.abs(out - ref_f32)))
        assert jnp.allclose(out, ref_bf16, atol=5e-3, rtol=5e-3), (name, err_bf)
        assert jnp.allclose(out, ref_f32, atol=1e-1, rtol=1e-1), (name, err_f32)

    # Fused single-kernel path; tile_n=32 forces a multi-tile grid with a ragged
    # last tile (100 rows -> 4 tiles of 32, last tile 4 valid rows).
    out_fused = jax.block_until_ready(mlp_forward(x, w1, w2, gamma, beta, tile_n=32))
    check(out_fused, "fused")

    # Two-phase fallback path (used when h cannot stay resident in VMEM) exercised
    # explicitly at the same small shapes.
    out_tp = jax.block_until_ready(
        mlp_forward(x, w1, w2, gamma, beta, tile_n=32, force_two_phase=True))
    check(out_tp, "two_phase")
    assert jnp.allclose(out_fused, out_tp, atol=5e-3, rtol=5e-3)

    # Default dispatch (fused, single tile covering the whole batch).
    out_default = jax.block_until_ready(mlp_forward(x, w1, w2, gamma, beta))
    check(out_default, "default")

    print("KERNEL_OK")
</pallas_src>

<mosaic_0001>
module attributes {stable_mosaic.version = 11 : i64} {
  func.func @_fused_kernel(%arg0: i32, %arg1: memref<32x16xf32, #tpu.memory_space<vmem>>, %arg2: memref<16x32xbf16, #tpu.memory_space<vmem>>, %arg3: memref<32x128xbf16, #tpu.memory_space<vmem>>, %arg4: memref<1x32xf32, #tpu.memory_space<vmem>>, %arg5: memref<1x32xf32, #tpu.memory_space<vmem>>, %arg6: memref<128x128xf32, #tpu.memory_space<vmem>>, %arg7: memref<128x32xf32, #tpu.memory_space<vmem>>, %arg8: memref<1x32xf32, #tpu.memory_space<vmem>>) attributes {dimension_semantics = [#tpu.dimension_semantics<arbitrary>], iteration_bounds = array<i64: 4>, scalar_prefetch = 0 : i64, scratch_operands = 2 : i64, tpu.core_type = #tpu.core_type<tc>, window_params = [{transform_indices = @transform_0, window_bounds = array<i64: 32, 16>}, {pipeline_mode = #tpu.pipeline_mode<synchronous>, transform_indices = @transform_1, window_bounds = array<i64: 16, 32>}, {pipeline_mode = #tpu.pipeline_mode<synchronous>, transform_indices = @transform_2, window_bounds = array<i64: 32, 128>}, {pipeline_mode = #tpu.pipeline_mode<synchronous>, transform_indices = @transform_3, window_bounds = array<i64: 1, 32>}, {pipeline_mode = #tpu.pipeline_mode<synchronous>, transform_indices = @transform_4, window_bounds = array<i64: 1, 32>}, {pipeline_mode = #tpu.pipeline_mode<synchronous>, transform_indices = @transform_5, window_bounds = array<i64: 128, 128>}]} {
    %c0_i32 = arith.constant 0 : i32
    %0 = arith.cmpi eq, %arg0, %c0_i32 : i32
    %1 = arith.extui %0 : i1 to i32
    %c0_i32_0 = arith.constant 0 : i32
    %2 = arith.cmpi ne, %1, %c0_i32_0 : i32
    scf.if %2 {
      %cst_13 = arith.constant 0.000000e+00 : f32
      %29 = vector.broadcast %cst_13 : f32 to vector<1x32xf32>
      %c0_14 = arith.constant 0 : index
      %c0_15 = arith.constant 0 : index
      %30 = vector.load %arg8[%c0_14, %c0_15] : memref<1x32xf32, #tpu.memory_space<vmem>>, vector<1x32xf32>
      tpu.vector_store %arg8[%c0_14, %c0_15], %29 {strides = array<i32>} : memref<1x32xf32, #tpu.memory_space<vmem>>, vector<1x32xf32>,
    } else {
    }
    %c0 = arith.constant 0 : index
    %c0_1 = arith.constant 0 : index
    %3 = vector.load %arg1[%c0, %c0_1] : memref<32x16xf32, #tpu.memory_space<vmem>>, vector<32x16xf32>
    %4 = arith.truncf %3 : vector<32x16xf32> to vector<32x16xbf16>
    %c0_2 = arith.constant 0 : index
    %c0_3 = arith.constant 0 : index
    %5 = vector.load %arg2[%c0_2, %c0_3] : memref<16x32xbf16, #tpu.memory_space<vmem>>, vector<16x32xbf16>
    %cst = arith.constant dense<0.000000e+00> : vector<32x32xf32>
    %6 = tpu.matmul %4, %5, %cst {dimension_numbers = #tpu.dot_dimension_numbers<[1], [0], [0], [1], [0, 0, 1, 1], [], []>} : vector<32x16xbf16>, vector<16x32xbf16>, vector<32x32xf32> -> vector<32x32xf32>
    %c32_i32 = arith.constant 32 : i32
    %7 = arith.muli %arg0, %c32_i32 : i32
    %8 = tpu.iota {dimensions = array<i32: 0>} : vector<32x1xi32>
    %9 = vector.broadcast %7 : i32 to vector<32x1xi32>
    %10 = arith.addi %9, %8 : vector<32x1xi32>
    %c100_i32 = arith.constant 100 : i32
    %11 = vector.broadcast %c100_i32 : i32 to vector<32x1xi32>
    %12 = arith.cmpi slt, %10, %11 : vector<32x1xi32>
    %cst_4 = arith.constant 0.000000e+00 : f32
    %13 = vector.shape_cast %12 : vector<32x1xi1> to vector<32x1xi1>
    %14 = vector.broadcast %13 : vector<32x1xi1> to vector<32x32xi1>
    %15 = vector.broadcast %cst_4 : f32 to vector<32x32xf32>
    %16 = arith.select %14, %6, %15 : vector<32x32xi1>, vector<32x32xf32>
    %c32_i32_5 = arith.constant 32 : i32
    %17 = arith.muli %arg0, %c32_i32_5 : i32
    %18 = tpu.assume_multiple %17, 8 : i32
    %19 = arith.index_cast %18 : i32 to index
    %c0_6 = arith.constant 0 : index
    %20 = vector.load %arg7[%19, %c0_6] : memref<128x32xf32, #tpu.memory_space<vmem>>, vector<32x32xf32>
    tpu.vector_store %arg7[%19, %c0_6], %16 {strides = array<i32>} : memref<128x32xf32, #tpu.memory_space<vmem>>, vector<32x32xf32>,
    %c0_7 = arith.constant 0 : index
    %c0_8 = arith.constant 0 : index
    %21 = vector.load %arg8[%c0_7, %c0_8] : memref<1x32xf32, #tpu.memory_space<vmem>>, vector<1x32xf32>
    %cst_9 = arith.constant dense<0.000000e+00> : vector<32xf32>
    %22 = vector.multi_reduction <add>, %16, %cst_9 [0] : vector<32x32xf32> to vector<32xf32>
    %23 = vector.shape_cast %22 : vector<32xf32> to vector<1x32xf32>
    %24 = arith.addf %21, %23 : vector<1x32xf32>
    %c0_10 = arith.constant 0 : index
    %c0_11 = arith.constant 0 : index
    %25 = vector.load %arg8[%c0_10, %c0_11] : memref<1x32xf32, #tpu.memory_space<vmem>>, vector<1x32xf32>
    tpu.vector_store %arg8[%c0_10, %c0_11], %24 {strides = array<i32>} : memref<1x32xf32, #tpu.memory_space<vmem>>, vector<1x32xf32>,
    %c3_i32 = arith.constant 3 : i32
    %26 = arith.cmpi eq, %arg0, %c3_i32 : i32
    %27 = arith.extui %26 : i1 to i32
    %c0_i32_12 = arith.constant 0 : i32
    %28 = arith.cmpi ne, %27, %c0_i32_12 : i32
    scf.if %28 {
      %c0_13 = arith.constant 0 : index
      %c0_14 = arith.constant 0 : index
      %29 = vector.load %arg8[%c0_13, %c0_14] : memref<1x32xf32, #tpu.memory_space<vmem>>, vector<1x32xf32>
      %cst_15 = arith.constant 0.00999999977 : f32
      %30 = vector.broadcast %cst_15 : f32 to vector<1x32xf32>
      %31 = arith.mulf %29, %30 : vector<1x32xf32>
      %c0_16 = arith.constant 0 : index
      %c0_17 = arith.constant 0 : index
      %32 = vector.load %arg7[%c0_16, %c0_17] : memref<128x32xf32, #tpu.memory_space<vmem>>, vector<128x32xf32>
      %33 = vector.broadcast %31 : vector<1x32xf32> to vector<128x32xf32>
      %34 = arith.subf %32, %33 : vector<128x32xf32>
      %35 = arith.mulf %34, %34 : vector<128x32xf32>
      %cst_18 = arith.constant dense<0.000000e+00> : vector<32xf32>
      %36 = vector.multi_reduction <add>, %35, %cst_18 [0] : vector<128x32xf32> to vector<32xf32>
      %37 = vector.shape_cast %36 : vector<32xf32> to vector<1x32xf32>
      %cst_19 = arith.constant 2.800000e+01 : f32
      %38 = vector.broadcast %cst_19 : f32 to vector<1x32xf32>
      %39 = arith.mulf %38, %31 : vector<1x32xf32>
      %40 = arith.mulf %39, %31 : vector<1x32xf32>
      %41 = arith.subf %37, %40 : vector<1x32xf32>
      %cst_20 = arith.constant 0.00999999977 : f32
      %42 = vector.broadcast %cst_20 : f32 to vector<1x32xf32>
      %43 = arith.mulf %41, %42 : vector<1x32xf32>
      %cst_21 = arith.constant 0.000000e+00 : f32
      %44 = vector.broadcast %cst_21 : f32 to vector<1x32xf32>
      %45 = arith.maximumf %43, %44 : vector<1x32xf32>
      %c0_22 = arith.constant 0 : index
      %c0_23 = arith.constant 0 : index
      %46 = vector.load %arg4[%c0_22, %c0_23] : memref<1x32xf32, #tpu.memory_space<vmem>>, vector<1x32xf32>
      %cst_24 = arith.constant 9.99999974E-6 : f32
      %47 = vector.broadcast %cst_24 : f32 to vector<1x32xf32>
      %48 = arith.addf %45, %47 : vector<1x32xf32>
      %49 = math.rsqrt %48 : vector<1x32xf32>
      %50 = arith.mulf %46, %49 : vector<1x32xf32>
      %c0_25 = arith.constant 0 : index
      %c0_26 = arith.constant 0 : index
      %51 = vector.load %arg5[%c0_25, %c0_26] : memref<1x32xf32, #tpu.memory_space<vmem>>, vector<1x32xf32>
      %52 = arith.mulf %31, %50 : vector<1x32xf32>
      %53 = arith.subf %51, %52 : vector<1x32xf32>
      %54 = vector.broadcast %50 : vector<1x32xf32> to vector<128x32xf32>
      %55 = arith.mulf %32, %54 : vector<128x32xf32>
      %56 = vector.broadcast %53 : vector<1x32xf32> to vector<128x32xf32>
      %57 = arith.addf %55, %56 : vector<128x32xf32>
      %cst_27 = arith.constant 0.000000e+00 : f32
      %58 = vector.broadcast %cst_27 : f32 to vector<128x32xf32>
      %59 = arith.maximumf %57, %58 : vector<128x32xf32>
      %60 = arith.truncf %59 : vector<128x32xf32> to vector<128x32xbf16>
      %c0_28 = arith.constant 0 : index
      %c0_29 = arith.constant 0 : index
      %61 = vector.load %arg3[%c0_28, %c0_29] : memref<32x128xbf16, #tpu.memory_space<vmem>>, vector<32x128xbf16>
      %cst_30 = arith.constant dense<0.000000e+00> : vector<128x128xf32>
      %62 = tpu.matmul %60, %61, %cst_30 {dimension_numbers = #tpu.dot_dimension_numbers<[1], [0], [0], [1], [0, 0, 1, 1], [], []>} : vector<128x32xbf16>, vector<32x128xbf16>, vector<128x128xf32> -> vector<128x128xf32>
      %c0_31 = arith.constant 0 : index
      %c0_32 = arith.constant 0 : index
      %63 = vector.load %arg6[%c0_31, %c0_32] : memref<128x128xf32, #tpu.memory_space<vmem>>, vector<128x128xf32>
      tpu.vector_store %arg6[%c0_31, %c0_32], %62 {strides = array<i32>} : memref<128x128xf32, #tpu.memory_space<vmem>>, vector<128x128xf32>,
    } else {
    }
    return
  }
  func.func @transform_0(%arg0: i32) -> (i32, i32) {
    %c0_i32 = arith.constant 0 : i32
    %c0_i32_0 = arith.constant 0 : i32
    return %arg0, %c0_i32 : i32, i32
  }
  func.func @transform_1(%arg0: i32) -> (i32, i32) {
    %c0_i32 = arith.constant 0 : i32
    %c0_i32_0 = arith.constant 0 : i32
    %c0_i32_1 = arith.constant 0 : i32
    return %c0_i32, %c0_i32_0 : i32, i32
  }
  func.func @transform_2(%arg0: i32) -> (i32, i32) {
    %c0_i32 = arith.constant 0 : i32
    %c0_i32_0 = arith.constant 0 : i32
    %c0_i32_1 = arith.constant 0 : i32
    return %c0_i32, %c0_i32_0 : i32, i32
  }
  func.func @transform_3(%arg0: i32) -> (i32, i32) {
    %c0_i32 = arith.constant 0 : i32
    %c0_i32_0 = arith.constant 0 : i32
    %c0_i32_1 = arith.constant 0 : i32
    return %c0_i32, %c0_i32_0 : i32, i32
  }
  func.func @transform_4(%arg0: i32) -> (i32, i32) {
    %c0_i32 = arith.constant 0 : i32
    %c0_i32_0 = arith.constant 0 : i32
    %c0_i32_1 = arith.constant 0 : i32
    return %c0_i32, %c0_i32_0 : i32, i32
  }
  func.func @transform_5(%arg0: i32) -> (i32, i32) {
    %c0_i32 = arith.constant 0 : i32
    %c0_i32_0 = arith.constant 0 : i32
    %c0_i32_1 = arith.constant 0 : i32
    return %c0_i32, %c0_i32_0 : i32, i32
  }
}

</mosaic_0001>

<llo_original>
// kernel: tpu_custom_call.1
$region0: #{tpu_custom_call.1}
  #allocation0 [shape = 'u32[]', space=smem, size = 0x4, offset = 0x4, fixed_abs, tag = 'smem constant byte address 0x4 - core index']
  #allocation1 [shape = 'u32[144,128]{1,0:T(1,128)}', space=vmem, size = 0x12000, scoped, tag = 'internal scratch']
  #allocation2 [shape = 'f32[128,32]{1,0:T(8,128)}', space=vmem, size = 0x10000, scoped, tag = 'scratch operand']
  #allocation3 [shape = 'f32[1,32]{1,0:T(1,128)}', space=vmem, size = 0x200, scoped, tag = 'scratch operand']
  %s0 = inlined_call_operand.vmem [shape: f32[100,16], index: 0, kind: input, shape index: {}]
  %s1 = inlined_call_operand.vmem [shape: bf16[16,32], index: 1, kind: input, shape index: {}]
  %s2 = inlined_call_operand.vmem [shape: bf16[32,128], index: 2, kind: input, shape index: {}]
  %s3 = inlined_call_operand.vmem [shape: f32[1,32], index: 3, kind: input, shape index: {}]
  %s4 = inlined_call_operand.vmem [shape: f32[1,32], index: 4, kind: input, shape index: {}]
  %s5 = inlined_call_operand.hbm [shape: f32[128,128], index: 5, kind: output, shape index: {}]
  %s6 = sld [smem:[#allocation0]]
  $region61: #{tpu_custom_call.1} parent=0
    _
  %s8 = ssub.s32 1, %s6
  %s9 = scalar_select 0, %s8, %s6
  $region1: #{tpu_custom_call.1} parent=0
    #allocation4 [shape = 'u8[65536]{0}', space=vmem, size = 0x10000, scoped, tag = 'output window, operand 0, single buffered']
    #allocation5 [shape = 's32[2]{0}', space=sflag, size = 0x8, scoped, tag = 'scoped memory for tpu_custom_call.1']
    %10 = vsyncpa [#allocation5], 0
    loop: start=0, step=1, limit=6
    $region2: #{tpu_custom_call.1} parent=1 // loop_pre_header
      _
    $region3: #{tpu_custom_call.1} parent=1 // loop_header
      %s12 = sphi 0, %s16
      %p13 = scmp.ge.s32.totalorder %s12, 6
      %s22 = sphi 0, %s24
      %s25 = sphi 0, %s22
      %s26 = sphi 0, %s25
      %s42 = sphi 0, %s26
      %s46 = sphi 0, %s46
      %s48 = sphi 0, %s46
      %s49 = sphi 0, %s48
      %s63 = sphi 0, %s49
      %s67 = sphi 0, %s67
      %s69 = sphi 0, %s67
      %s70 = sphi 0, %s69
      %s84 = sphi 0, %s70
      %s88 = sphi 0, %s88
      %s90 = sphi 0, %s88
      %s91 = sphi 0, %s90
      %s105 = sphi 0, %s91
      %s109 = sphi 0, %s109
      %s111 = sphi 0, %s109
      %s112 = sphi 0, %s111
      %s126 = sphi 0, %s112
      %s130 = sphi 0, %s130
      %s132 = sphi 0, %s130
      %s133 = sphi 0, %s132
      %s147 = sphi 0, %s133
    $region4: #{tpu_custom_call.1} parent=1 // loop_header_branch
      %15 = sbr.rel (%p13) target = $region8
    $region5: #{tpu_custom_call.1} parent=1 // loop_body
      %s17 = ssub.s32 %s12, 1
      %s18 = ssub.s32 %s12, 2
      %s19 = sadd.s32 %s12, 1
      %s20 = ssub.s32 %s12, %s19
      %p21 = scmp.eq.s32.totalorder %s20, 0
      %s23 = sadd.s32 %s22, 1
      %s24 = scalar_select %p21, %s22, %s23
      %p27 = pneg %p21
      %p28 = scmp.eq.s32.totalorder %s12, 3
      %p29 = por %p27, %p28
      %p30 = scmp.ne.s32.totalorder %s22, %s25
      %p31 = scmp.eq.s32.totalorder %s12, 0
      %p32 = por %p30, %p31
      %p33 = scmp.ne.s32.totalorder %s22, %s25
      %p34 = scmp.eq.s32.totalorder %s17, 3
      %p35 = por %p33, %p34
      %p36 = scmp.ne.s32.totalorder %s25, %s26
      %p37 = scmp.eq.s32.totalorder %s17, 0
      %p38 = por %p36, %p37
      %p39 = scmp.ne.s32.totalorder %s25, %s26
      %p40 = scmp.eq.s32.totalorder %s18, 3
      %p41 = por %p39, %p40
      %p43 = scmp.ne.s32.totalorder %s26, %s42
      %p44 = scmp.eq.s32.totalorder %s18, 0
      %p45 = por %p43, %p44
      %s47 = sadd.s32 %s46, 1
      %p50 = scmp.eq.s32.totalorder %s12, 3
      %p51 = scmp.ne.s32.totalorder %s46, %s48
      %p52 = scmp.eq.s32.totalorder %s12, 0
      %p53 = por %p51, %p52
      %p54 = scmp.ne.s32.totalorder %s46, %s48
      %p55 = scmp.eq.s32.totalorder %s17, 3
      %p56 = por %p54, %p55
      %p57 = scmp.ne.s32.totalorder %s48, %s49
      %p58 = scmp.eq.s32.totalorder %s17, 0
      %p59 = por %p57, %p58
      %p60 = scmp.ne.s32.totalorder %s48, %s49
      %p61 = scmp.eq.s32.totalorder %s18, 3
      %p62 = por %p60, %p61
      %p64 = scmp.ne.s32.totalorder %s49, %s63
      %p65 = scmp.eq.s32.totalorder %s18, 0
      %p66 = por %p64, %p65
      %s68 = sadd.s32 %s67, 1
      %p71 = scmp.eq.s32.totalorder %s12, 3
      %p72 = scmp.ne.s32.totalorder %s67, %s69
      %p73 = scmp.eq.s32.totalorder %s12, 0
      %p74 = por %p72, %p73
      %p75 = scmp.ne.s32.totalorder %s67, %s69
      %p76 = scmp.eq.s32.totalorder %s17, 3
      %p77 = por %p75, %p76
      %p78 = scmp.ne.s32.totalorder %s69, %s70
      %p79 = scmp.eq.s32.totalorder %s17, 0
      %p80 = por %p78, %p79
      %p81 = scmp.ne.s32.totalorder %s69, %s70
      %p82 = scmp.eq.s32.totalorder %s18, 3
      %p83 = por %p81, %p82
      %p85 = scmp.ne.s32.totalorder %s70, %s84
      %p86 = scmp.eq.s32.totalorder %s18, 0
      %p87 = por %p85, %p86
      %s89 = sadd.s32 %s88, 1
      %p92 = scmp.eq.s32.totalorder %s12, 3
      %p93 = scmp.ne.s32.totalorder %s88, %s90
      %p94 = scmp.eq.s32.totalorder %s12, 0
      %p95 = por %p93, %p94
      %p96 = scmp.ne.s32.totalorder %s88, %s90
      %p97 = scmp.eq.s32.totalorder %s17, 3
      %p98 = por %p96, %p97
      %p99 = scmp.ne.s32.totalorder %s90, %s91
      %p100 = scmp.eq.s32.totalorder %s17, 0
      %p101 = por %p99, %p100
      %p102 = scmp.ne.s32.totalorder %s90, %s91
      %p103 = scmp.eq.s32.totalorder %s18, 3
      %p104 = por %p102, %p103
      %p106 = scmp.ne.s32.totalorder %s91, %s105
      %p107 = scmp.eq.s32.totalorder %s18, 0
      %p108 = por %p106, %p107
      %s110 = sadd.s32 %s109, 1
      %p113 = scmp.eq.s32.totalorder %s12, 3
      %p114 = scmp.ne.s32.totalorder %s109, %s111
      %p115 = scmp.eq.s32.totalorder %s12, 0
      %p116 = por %p114, %p115
      %p117 = scmp.ne.s32.totalorder %s109, %s111
      %p118 = scmp.eq.s32.totalorder %s17, 3
      %p119 = por %p117, %p118
      %p120 = scmp.ne.s32.totalorder %s111, %s112
      %p121 = scmp.eq.s32.totalorder %s17, 0
      %p122 = por %p120, %p121
      %p123 = scmp.ne.s32.totalorder %s111, %s112
      %p124 = scmp.eq.s32.totalorder %s18, 3
      %p125 = por %p123, %p124
      %p127 = scmp.ne.s32.totalorder %s112, %s126
      %p128 = scmp.eq.s32.totalorder %s18, 0
      %p129 = por %p127, %p128
      %s131 = sadd.s32 %s130, 1
      %p134 = scmp.eq.s32.totalorder %s12, 3
      %p135 = scmp.ne.s32.totalorder %s130, %s132
      %p136 = scmp.eq.s32.totalorder %s12, 0
      %p137 = por %p135, %p136
      %p138 = scmp.ne.s32.totalorder %s130, %s132
      %p139 = scmp.eq.s32.totalorder %s17, 3
      %p140 = por %p138, %p139
      %p141 = scmp.ne.s32.totalorder %s132, %s133
      %p142 = scmp.eq.s32.totalorder %s17, 0
      %p143 = por %p141, %p142
      %p144 = scmp.ne.s32.totalorder %s132, %s133
      %p145 = scmp.eq.s32.totalorder %s18, 3
      %p146 = por %p144, %p145
      %p148 = scmp.ne.s32.totalorder %s133, %s147
      %p149 = scmp.eq.s32.totalorder %s18, 0
      %p150 = por %p148, %p149
      %p151 = scmp.le.s32.totalorder 1, %s12
      %p152 = scmp.lt.s32.totalorder %s12, 5
      %p153 = pnand %p151, %p152
      %p154 = pneg %p153
      // Predicated region
      $region9: #{tpu_custom_call.1} parent=5 // pred_check
        _
      $region10: #{tpu_custom_call.1} parent=5 // pred_check_branch
        %156 = sbr.rel (%p153) target = $region12
      $region11: #{tpu_custom_call.1} parent=5 // pred_region
        %s157 = ssub.s32 %s12, 1
        // Predicated region
        $region13: #{tpu_custom_call.1} parent=11 // pred_check
          %p158 = pneg %p59
        $region14: #{tpu_custom_call.1} parent=11 // pred_check_branch
          %160 = sbr.rel (%p158) target = $region16
        $region15: #{tpu_custom_call.1} parent=11 // pred_region
          _
        $region16: #{tpu_custom_call.1} parent=11 // pred_fallthru
          _
        // Predicated region
        $region17: #{tpu_custom_call.1} parent=11 // pred_check
          %p161 = pneg %p80
        $region18: #{tpu_custom_call.1} parent=11 // pred_check_branch
          %163 = sbr.rel (%p161) target = $region20
        $region19: #{tpu_custom_call.1} parent=11 // pred_region
          _
        $region20: #{tpu_custom_call.1} parent=11 // pred_fallthru
          _
        // Predicated region
        $region21: #{tpu_custom_call.1} parent=11 // pred_check
          %p164 = pneg %p101
        $region22: #{tpu_custom_call.1} parent=11 // pred_check_branch
          %166 = sbr.rel (%p164) target = $region24
        $region23: #{tpu_custom_call.1} parent=11 // pred_region
          _
        $region24: #{tpu_custom_call.1} parent=11 // pred_fallthru
          _
        // Predicated region
        $region25: #{tpu_custom_call.1} parent=11 // pred_check
          %p167 = pneg %p122
        $region26: #{tpu_custom_call.1} parent=11 // pred_check_branch
          %169 = sbr.rel (%p167) target = $region28
        $region27: #{tpu_custom_call.1} parent=11 // pred_region
          _
        $region28: #{tpu_custom_call.1} parent=11 // pred_fallthru
          _
      $region12: #{tpu_custom_call.1} parent=5 // pred_fallthru
        _
      %p170 = scmp.lt.s32.totalorder %s12, 4
      // Predicated region
      $region29: #{tpu_custom_call.1} parent=5 // pred_check
        %p171 = pneg %p170
      $region30: #{tpu_custom_call.1} parent=5 // pred_check_branch
        %173 = sbr.rel (%p171) target = $region32
      $region31: #{tpu_custom_call.1} parent=5 // pred_region
        // Predicated region
        $region33: #{tpu_custom_call.1} parent=31 // pred_check
          %p174 = pneg %p32
        $region34: #{tpu_custom_call.1} parent=31 // pred_check_branch
          %176 = sbr.rel (%p174) target = $region36
        $region35: #{tpu_custom_call.1} parent=31 // pred_region
          %s177 = smul.u32 4, %s12
          %s178 = ssub.s32 13, %s177
          %p179 = scmp.lt.s32.totalorder %s178, 4
          %s180 = scalar_select %p179, %s178, 4
          %s181 = smul.u32 128, %s180
          %p182 = scmp.lt.s32.totalorder %s177, 12
          %s183 = scalar_select %p182, %s177, 12
          %s184 = smul.addr %s183, 8
          %s185 = scalar_lea.vmem %s0, %s184
          %s186 = smul.u32 4, %s12
          %s187 = ssub.s32 13, %s186
          %p188 = scmp.lt.s32.totalorder %s187, 4
          %s189 = scalar_select %p188, %s187, 4
          %s190 = smul.u32 128, %s189
        $region36: #{tpu_custom_call.1} parent=31 // pred_fallthru
          _
      $region32: #{tpu_custom_call.1} parent=5 // pred_fallthru
        _
      %p191 = scmp.le.s32.totalorder 1, %s12
      %p192 = scmp.lt.s32.totalorder %s12, 5
      %p193 = pnand %p191, %p192
      %p194 = pneg %p193
      // Predicated region
      $region37: #{tpu_custom_call.1} parent=5 // pred_check
        _
      $region38: #{tpu_custom_call.1} parent=5 // pred_check_branch
        %196 = sbr.rel (%p193) target = $region40
      $region39: #{tpu_custom_call.1} parent=5 // pred_region
        %s197 = ssub.s32 %s12, 1
        %s198 = smul.u32 4, %s17
        %s199 = ssub.s32 13, %s198
        %p200 = scmp.lt.s32.totalorder %s199, 4
        %s201 = scalar_select %p200, %s199, 4
        %s202 = smul.u32 128, %s201
        %p203 = scmp.lt.s32.totalorder %s198, 12
        %s204 = scalar_select %p203, %s198, 12
        %s205 = smul.addr %s204, 8
        %s206 = scalar_lea.vmem %s0, %s205
        %p207 = pneg %p38
        %p208 = pneg %p35
        %p209 = pneg %p59
        %p210 = pneg %p56
        %p211 = pneg %p80
        %p212 = pneg %p77
        %p213 = pneg %p101
        %p214 = pneg %p98
        %p215 = pneg %p122
        %p216 = pneg %p119
        %p217 = pneg %p143
        %p218 = pneg %p140
        %s219 = smul.u32 4, %s17
        %s220 = ssub.s32 13, %s219
        %p221 = scmp.lt.s32.totalorder %s220, 4
        %s222 = scalar_select %p221, %s220, 4
        %s223 = smul.u32 128, %s222
        %p224 = scmp.lt.s32.totalorder %s219, 12
        %s225 = scalar_select %p224, %s219, 12
        %s226 = smul.addr %s225, 8
        %s227 = scalar_lea.vmem %s0, %s226
        %s228 = smul.u32 4, %s17
        %s229 = ssub.s32 13, %s228
        %p230 = scmp.lt.s32.totalorder %s229, 4
        %s231 = scalar_select %p230, %s229, 4
        %s232 = smul.u32 128, %s231
        %p234 = scmp.eq.s32.totalorder %s17, 0
        // Predicated region
        $region41: #{tpu_custom_call.1} parent=39 // pred_check
          %p235 = pneg %p234
        $region42: #{tpu_custom_call.1} parent=39 // pred_check_branch
          %237 = sbr.rel (%p235) target = $region44
        $region43: #{tpu_custom_call.1} parent=39 // pred_region
          %vm238 = vcmask 253952
          %239 = vst.msk [vmem:[#allocation3] sm:$0x1] %vm238, 0.0
        $region44: #{tpu_custom_call.1} parent=39 // pred_fallthru
          _
        %v240 = vld [vmem:[%s227] sm:$0xff]
        %v241 = vld [vmem:[%s227 + $0x8] sm:$0xff]
        %v242 = vld [vmem:[%s227 + $0x10] sm:$0xff]
        %v243 = vld [vmem:[%s227 + $0x18] sm:$0xff]
        %v244 = vpack.c.bf16 %v241, %v240
        %v245 = vpack.c.bf16 %v243, %v242
        %v246 = vld [vmem:[%s1] sm:$0xf]
        %v247 = vld [vmem:[%s1 + $0x4] sm:$0xf]
        %v250 = vunpack.c.l.b16 %v246
        %v251 = vunpack.c.l.b16 %v247
        %v252 = vpack.c.b16 %v251, %v250
        %vm254 = vcmask 130048
        %v256 = vsel %vm254, %v244, 0
        %v259 = vsel %vm254, %v245, 0
        %261 = vmatprep.subr.bf16.mxu0 0
        %262 = vmatpush1.bf16.msra.mxu0 %v252
        %263 = vmatprep.subr.bf16.mxu0 0
        %264 = vmatpush1.bf16.msra.mxu0 0
        %265 = vmatprep.subr.bf16.mxu0 0
        %266 = vmatpush1.bf16.msra.mxu0 0
        %267 = vmatprep.subr.bf16.mxu0 0
        %268 = vmatpush1.bf16.msra.mxu0 0
        %269 = vmatprep.subr.bf16.mxu0 0
        %270 = vmatpush1.bf16.msra.mxu0 0
        %271 = vmatprep.subr.bf16.mxu0 0
        %272 = vmatpush1.bf16.msra.mxu0 0
        %273 = vmatprep.subr.bf16.mxu0 0
        %274 = vmatpush1.bf16.msra.mxu0 0
        %275 = vmatprep.subr.bf16.mxu0 0
        %276 = vmatpush1.bf16.msra.mxu0 0
        %277 = vmatprep.subr.bf16.mxu0 0
        %278 = vmatpush1.bf16.msra.mxu0 0
        %279 = vmatprep.subr.bf16.mxu0 0
        %280 = vmatpush1.bf16.msra.mxu0 0
        %281 = vmatprep.subr.bf16.mxu0 0
        %282 = vmatpush1.bf16.msra.mxu0 0
        %283 = vmatprep.subr.bf16.mxu0 0
        %284 = vmatpush1.bf16.msra.mxu0 0
        %285 = vmatprep.subr.bf16.mxu0 0
        %286 = vmatpush1.bf16.msra.mxu0 0
        %287 = vmatprep.subr.bf16.mxu0 0
        %288 = vmatpush1.bf16.msra.mxu0 0
        %289 = vmatprep.subr.bf16.mxu0 0
        %290 = vmatpush1.bf16.msra.mxu0 0
        %291 = vmatprep.subr.bf16.mxu0 0
        %292 = vmatpush1.bf16.msra.mxu0 0
        %293 = vmatprep.mubr.bf16.mxu0 0
        %294 = vmatmul.mubr.bf16.gmra.mrb[0].mxu0 %v256
        %v295 = vpop.f32.mrb[0].mxu0
        %v296 = vadd.f32 0.0, %v295
        %v297 = vpop.f32.mrb[0].mxu0
        %v298 = vpop.f32.mrb[0].mxu0
        %v299 = vadd.f32 0.0, %v298
        %v300 = vpop.f32.mrb[0].mxu0
        %301 = vmatprep.mubr.bf16.mxu0 0
        %302 = vmatmul.mubr.bf16.gmra.mrb[0].mxu0 %v259
        %v303 = vpop.f32.mrb[0].mxu0
        %v304 = vadd.f32 0.0, %v303
        %v305 = vpop.f32.mrb[0].mxu0
        %v306 = vpop.f32.mrb[0].mxu0
        %v307 = vadd.f32 0.0, %v306
        %v308 = vpop.f32.mrb[0].mxu0
        %309 = vdwg.mxu0
        %s310 = smul.u32 %s17, 32
        %v311 = vlaneseq
        %v312 = vshrl.u32 %v311, 7
        %v313 = vadd.s32 %v312, 8
        %v314 = vadd.s32 %v312, 16
        %v315 = vadd.s32 %v312, 24
        %v316 = vstv %s310
        %v317 = vadd.s32 %v316, %v312
        %v318 = vadd.s32 %v316, %v313
        %v319 = vadd.s32 %v316, %v314
        %v320 = vadd.s32 %v316, %v315
        %vm321 = vcmp.lt.s32.totalorder %v317, 100
        %vm322 = vcmp.lt.s32.totalorder %v318, 100
        %vm323 = vcmp.lt.s32.totalorder %v319, 100
        %vm324 = vcmp.lt.s32.totalorder %v320, 100
        %v325 = vsel %vm321, 1, 0
        %v326 = vsel %vm322, 1, 0
        %v327 = vsel %vm323, 1, 0
        %v328 = vsel %vm324, 1, 0
        %vm329 = vcmp.eq.s32.totalorder %v325, 1
        %vm330 = vcmp.eq.s32.totalorder %v326, 1
        %vm331 = vcmp.eq.s32.totalorder %v327, 1
        %vm332 = vcmp.eq.s32.totalorder %v328, 1
        %v333 = vsel %vm329, %v296, 0.0
        %v334 = vsel %vm330, %v299, 0.0
        %v335 = vsel %vm331, %v304, 0.0
        %v336 = vsel %vm332, %v307, 0.0
        %s337 = scalar_lea.vmem [#allocation2], %s310
        %vm338 = vcmask 261120
        %339 = vst.msk [vmem:[%s337] sm:$0xff] %vm338, %v333
        %340 = vst.msk [vmem:[%s337 + $0x8] sm:$0xff] %vm338, %v334
        %341 = vst.msk [vmem:[%s337 + $0x10] sm:$0xff] %vm338, %v335
        %342 = vst.msk [vmem:[%s337 + $0x18] sm:$0xff] %vm338, %v336
        %v343 = vld [vmem:[#allocation3] sm:$0x1]
        %v344 = vsel %vm338, %v333, 0.0
        %v345 = vsel %vm338, %v334, 0.0
        %v346 = vadd.f32 %v344, %v345
        %v347 = vsel %vm338, %v335, 0.0
        %v348 = vadd.f32 %v346, %v347
        %v349 = vsel %vm338, %v336, 0.0
        %v350 = vadd.f32 %v348, %v349
        %v351 = vrot.slane %v350, 4
        %v352 = vadd.f32 %v350, %v351
        %v353 = vrot.slane %v352, 2
        %v354 = vadd.f32 %v352, %v353
        %v355 = vrot.slane %v354, 1
        %v356 = vadd.f32 %v354, %v355
        %v357 = vadd.f32 %v343, %v356
        %vm358 = vcmask 253952
        %359 = vst.msk [vmem:[#allocation3] sm:$0x1] %vm358, %v357
        %p360 = scmp.eq.s32.totalorder %s17, 3
        // Predicated region
        $region45: #{tpu_custom_call.1} parent=39 // pred_check
          %p361 = pneg %p360
        $region46: #{tpu_custom_call.1} parent=39 // pred_check_branch
          %363 = sbr.rel (%p361) target = $region48
        $region47: #{tpu_custom_call.1} parent=39 // pred_region
          %v364 = vld [vmem:[#allocation3] sm:$0x1]
          %v365 = vmul.f32 %v364, 0.01
          %v366 = vld [vmem:[#allocation2] sm:$0xff]
          %v367 = vld [vmem:[#allocation2 + $0x8] sm:$0xff]
          %v368 = vld [vmem:[#allocation2 + $0x10] sm:$0xff]
          %v369 = vld [vmem:[#allocation2 + $0x18] sm:$0xff]
          %v370 = vld [vmem:[#allocation2 + $0x20] sm:$0xff]
          %v371 = vld [vmem:[#allocation2 + $0x28] sm:$0xff]
          %v372 = vld [vmem:[#allocation2 + $0x30] sm:$0xff]
          %v373 = vld [vmem:[#allocation2 + $0x38] sm:$0xff]
          %v374 = vld [vmem:[#allocation2 + $0x40] sm:$0xff]
          %v375 = vld [vmem:[#allocation2 + $0x48] sm:$0xff]
          %v376 = vld [vmem:[#allocation2 + $0x50] sm:$0xff]
          %v377 = vld [vmem:[#allocation2 + $0x58] sm:$0xff]
          %v378 = vld [vmem:[#allocation2 + $0x60] sm:$0xff]
          %v379 = vld [vmem:[#allocation2 + $0x68] sm:$0xff]
          %v380 = vld [vmem:[#allocation2 + $0x70] sm:$0xff]
          %v381 = vld [vmem:[#allocation2 + $0x78] sm:$0xff]
          %v383 = vlaneseq
          %v384 = vshrl.u32 %v383, 7
          %v385 = vsub.s32 0, %v384
          %v386 = vrot.slane %v365, %v385
          %v388 = vsub.f32 %v366, %v386
          %v389 = vsub.f32 %v367, %v386
          %v390 = vsub.f32 %v368, %v386
          %v391 = vsub.f32 %v369, %v386
          %v392 = vsub.f32 %v370, %v386
          %v393 = vsub.f32 %v371, %v386
          %v394 = vsub.f32 %v372, %v386
          %v395 = vsub.f32 %v373, %v386
          %v396 = vsub.f32 %v374, %v386
          %v397 = vsub.f32 %v375, %v386
          %v398 = vsub.f32 %v376, %v386
          %v399 = vsub.f32 %v377, %v386
          %v400 = vsub.f32 %v378, %v386
          %v401 = vsub.f32 %v379, %v386
          %v402 = vsub.f32 %v380, %v386
          %v403 = vsub.f32 %v381, %v386
          %v404 = vmul.f32 %v388, %v388
          %v405 = vmul.f32 %v389, %v389
          %v406 = vmul.f32 %v390, %v390
          %v407 = vmul.f32 %v391, %v391
          %v408 = vmul.f32 %v392, %v392
          %v409 = vmul.f32 %v393, %v393
          %v410 = vmul.f32 %v394, %v394
          %v411 = vmul.f32 %v395, %v395
          %v412 = vmul.f32 %v396, %v396
          %v413 = vmul.f32 %v397, %v397
          %v414 = vmul.f32 %v398, %v398
          %v415 = vmul.f32 %v399, %v399
          %v416 = vmul.f32 %v400, %v400
          %v417 = vmul.f32 %v401, %v401
          %v418 = vmul.f32 %v402, %v402
          %v419 = vmul.f32 %v403, %v403
          %v420 = vsel %vm338, %v404, 0.0
          %v421 = vsel %vm338, %v405, 0.0
          %v422 = vadd.f32 %v420, %v421
          %v423 = vsel %vm338, %v406, 0.0
          %v424 = vadd.f32 %v422, %v423
          %v425 = vsel %vm338, %v407, 0.0
          %v426 = vadd.f32 %v424, %v425
          %v427 = vsel %vm338, %v408, 0.0
          %v428 = vadd.f32 %v426, %v427
          %v429 = vsel %vm338, %v409, 0.0
          %v430 = vadd.f32 %v428, %v429
          %v431 = vsel %vm338, %v410, 0.0
          %v432 = vadd.f32 %v430, %v431
          %v433 = vsel %vm338, %v411, 0.0
          %v434 = vadd.f32 %v432, %v433
          %v435 = vsel %vm338, %v412, 0.0
          %v436 = vadd.f32 %v434, %v435
          %v437 = vsel %vm338, %v413, 0.0
          %v438 = vadd.f32 %v436, %v437
          %v439 = vsel %vm338, %v414, 0.0
          %v440 = vadd.f32 %v438, %v439
          %v441 = vsel %vm338, %v415, 0.0
          %v442 = vadd.f32 %v440, %v441
          %v443 = vsel %vm338, %v416, 0.0
          %v444 = vadd.f32 %v442, %v443
          %v445 = vsel %vm338, %v417, 0.0
          %v446 = vadd.f32 %v444, %v445
          %v447 = vsel %vm338, %v418, 0.0
          %v448 = vadd.f32 %v446, %v447
          %v449 = vsel %vm338, %v419, 0.0
          %v450 = vadd.f32 %v448, %v449
          %v451 = vrot.slane %v450, 4
          %v452 = vadd.f32 %v450, %v451
          %v453 = vrot.slane %v452, 2
          %v454 = vadd.f32 %v452, %v453
          %v455 = vrot.slane %v454, 1
          %v456 = vadd.f32 %v454, %v455
          %v457 = vmul.f32 %v365, 28.0
          %v458 = vmul.f32 %v457, %v365
          %v459 = vsub.f32 %v456, %v458
          %v460 = vmul.f32 %v459, 0.01
          %v461 = vmax.f32 %v460, 0.0
          %v462 = vld [vmem:[%s3] sm:$0x1]
          %v463 = vadd.f32 %v461, 1e-05
          %v464 = vrsqrt.pop %v463
          %v465 = vmul.f32 %v462, %v464
          %v466 = vld [vmem:[%s4] sm:$0x1]
          %v467 = vmul.f32 %v365, %v465
          %v468 = vsub.f32 %v466, %v467
          %v470 = vlaneseq
          %v471 = vshrl.u32 %v470, 7
          %v472 = vsub.s32 0, %v471
          %v473 = vrot.slane %v465, %v472
          %v475 = vmul.f32 %v366, %v473
          %v476 = vmul.f32 %v367, %v473
          %v477 = vmul.f32 %v368, %v473
          %v478 = vmul.f32 %v369, %v473
          %v479 = vmul.f32 %v370, %v473
          %v480 = vmul.f32 %v371, %v473
          %v481 = vmul.f32 %v372, %v473
          %v482 = vmul.f32 %v373, %v473
          %v483 = vmul.f32 %v374, %v473
          %v484 = vmul.f32 %v375, %v473
          %v485 = vmul.f32 %v376, %v473
          %v486 = vmul.f32 %v377, %v473
          %v487 = vmul.f32 %v378, %v473
          %v488 = vmul.f32 %v379, %v473
          %v489 = vmul.f32 %v380, %v473
          %v490 = vmul.f32 %v381, %v473
          %v492 = vlaneseq
          %v493 = vshrl.u32 %v492, 7
          %v494 = vsub.s32 0, %v493
          %v495 = vrot.slane %v468, %v494
          %v497 = vadd.f32 %v475, %v495
          %v498 = vadd.f32 %v476, %v495
          %v499 = vadd.f32 %v477, %v495
          %v500 = vadd.f32 %v478, %v495
          %v501 = vadd.f32 %v479, %v495
          %v502 = vadd.f32 %v480, %v495
          %v503 = vadd.f32 %v481, %v495
          %v504 = vadd.f32 %v482, %v495
          %v505 = vadd.f32 %v483, %v495
          %v506 = vadd.f32 %v484, %v495
          %v507 = vadd.f32 %v485, %v495
          %v508 = vadd.f32 %v486, %v495
          %v509 = vadd.f32 %v487, %v495
          %v510 = vadd.f32 %v488, %v495
          %v511 = vadd.f32 %v489, %v495
          %v512 = vadd.f32 %v490, %v495
          %v513 = vmax.f32 %v497, 0.0
          %v514 = vmax.f32 %v498, 0.0
          %v515 = vmax.f32 %v499, 0.0
          %v516 = vmax.f32 %v500, 0.0
          %v517 = vmax.f32 %v501, 0.0
          %v518 = vmax.f32 %v502, 0.0
          %v519 = vmax.f32 %v503, 0.0
          %v520 = vmax.f32 %v504, 0.0
          %v521 = vmax.f32 %v505, 0.0
          %v522 = vmax.f32 %v506, 0.0
          %v523 = vmax.f32 %v507, 0.0
          %v524 = vmax.f32 %v508, 0.0
          %v525 = vmax.f32 %v509, 0.0
          %v526 = vmax.f32 %v510, 0.0
          %v527 = vmax.f32 %v511, 0.0
          %v528 = vmax.f32 %v512, 0.0
          %v529 = vpack.c.bf16 %v514, %v513
          %v530 = vpack.c.bf16 %v516, %v515
          %v531 = vpack.c.bf16 %v518, %v517
          %v532 = vpack.c.bf16 %v520, %v519
          %v533 = vpack.c.bf16 %v522, %v521
          %v534 = vpack.c.bf16 %v524, %v523
          %v535 = vpack.c.bf16 %v526, %v525
          %v536 = vpack.c.bf16 %v528, %v527
          %v537 = vld [vmem:[%s2] sm:$0xf]
          %v538 = vld [vmem:[%s2 + $0x4] sm:$0xf]
          %v539 = vld [vmem:[%s2 + $0x8] sm:$0xf]
          %v540 = vld [vmem:[%s2 + $0xc] sm:$0xf]
          %v545 = vunpack.c.l.b16 %v537
          %v546 = vunpack.c.l.b16 %v538
          %v547 = vunpack.c.l.b16 %v539
          %v548 = vunpack.c.l.b16 %v540
          %v549 = vpack.c.b16 %v546, %v545
          %v550 = vpack.c.b16 %v548, %v547
          %v554 = vsel %vm338, %v529, 0
          %v557 = vsel %vm338, %v530, 0
          %v560 = vsel %vm338, %v531, 0
          %v563 = vsel %vm338, %v532, 0
          %v566 = vsel %vm338, %v533, 0
          %v569 = vsel %vm338, %v534, 0
          %v572 = vsel %vm338, %v535, 0
          %v575 = vsel %vm338, %v536, 0
          %577 = vmatprep.subr.bf16.mxu0 0
          %578 = vmatpush1.bf16.msra.mxu0 %v549
          %579 = vmatprep.subr.bf16.mxu0 0
          %580 = vmatpush1.bf16.msra.mxu0 %v550
          %581 = vmatprep.subr.bf16.mxu0 0
          %582 = vmatpush1.bf16.msra.mxu0 0
          %583 = vmatprep.subr.bf16.mxu0 0
          %584 = vmatpush1.bf16.msra.mxu0 0
          %585 = vmatprep.subr.bf16.mxu0 0
          %586 = vmatpush1.bf16.msra.mxu0 0
          %587 = vmatprep.subr.bf16.mxu0 0
          %588 = vmatpush1.bf16.msra.mxu0 0
          %589 = vmatprep.subr.bf16.mxu0 0
          %590 = vmatpush1.bf16.msra.mxu0 0
          %591 = vmatprep.subr.bf16.mxu0 0
          %592 = vmatpush1.bf16.msra.mxu0 0
          %593 = vmatprep.subr.bf16.mxu0 0
          %594 = vmatpush1.bf16.msra.mxu0 0
          %595 = vmatprep.subr.bf16.mxu0 0
          %596 = vmatpush1.bf16.msra.mxu0 0
          %597 = vmatprep.subr.bf16.mxu0 0
          %598 = vmatpush1.bf16.msra.mxu0 0
          %599 = vmatprep.subr.bf16.mxu0 0
          %600 = vmatpush1.bf16.msra.mxu0 0
          %601 = vmatprep.subr.bf16.mxu0 0
          %602 = vmatpush1.bf16.msra.mxu0 0
          %603 = vmatprep.subr.bf16.mxu0 0
          %604 = vmatpush1.bf16.msra.mxu0 0
          %605 = vmatprep.subr.bf16.mxu0 0
          %606 = vmatpush1.bf16.msra.mxu0 0
          %607 = vmatprep.subr.bf16.mxu0 0
          %608 = vmatpush1.bf16.msra.mxu0 0
          %609 = vmatprep.mubr.bf16.mxu0 0
          %610 = vmatmul.mubr.bf16.gmra.mrb[0].mxu0 %v554
          %v611 = vpop.f32.mrb[0].mxu0
          %v612 = vadd.f32 0.0, %v611
          %v613 = vpop.f32.mrb[0].mxu0
          %v614 = vpop.f32.mrb[0].mxu0
          %v615 = vadd.f32 0.0, %v614
          %v616 = vpop.f32.mrb[0].mxu0
          %617 = vmatprep.mubr.bf16.mxu0 0
          %618 = vmatmul.mubr.bf16.gmra.mrb[0].mxu0 %v557
          %v619 = vpop.f32.mrb[0].mxu0
          %v620 = vadd.f32 0.0, %v619
          %v621 = vpop.f32.mrb[0].mxu0
          %v622 = vpop.f32.mrb[0].mxu0
          %v623 = vadd.f32 0.0, %v622
          %v624 = vpop.f32.mrb[0].mxu0
          %625 = vmatprep.mubr.bf16.mxu0 0
          %626 = vmatmul.mubr.bf16.gmra.mrb[0].mxu0 %v560
          %v627 = vpop.f32.mrb[0].mxu0
          %v628 = vadd.f32 0.0, %v627
          %v629 = vpop.f32.mrb[0].mxu0
          %v630 = vpop.f32.mrb[0].mxu0
          %v631 = vadd.f32 0.0, %v630
          %v632 = vpop.f32.mrb[0].mxu0
          %633 = vmatprep.mubr.bf16.mxu0 0
          %634 = vmatmul.mubr.bf16.gmra.mrb[0].mxu0 %v563
          %v635 = vpop.f32.mrb[0].mxu0
          %v636 = vadd.f32 0.0, %v635
          %v637 = vpop.f32.mrb[0].mxu0
          %v638 = vpop.f32.mrb[0].mxu0
          %v639 = vadd.f32 0.0, %v638
          %v640 = vpop.f32.mrb[0].mxu0
          %641 = vmatprep.mubr.bf16.mxu0 0
          %642 = vmatmul.mubr.bf16.gmra.mrb[0].mxu0 %v566
          %v643 = vpop.f32.mrb[0].mxu0
          %v644 = vadd.f32 0.0, %v643
          %v645 = vpop.f32.mrb[0].mxu0
          %v646 = vpop.f32.mrb[0].mxu0
          %v647 = vadd.f32 0.0, %v646
          %v648 = vpop.f32.mrb[0].mxu0
          %649 = vmatprep.mubr.bf16.mxu0 0
          %650 = vmatmul.mubr.bf16.gmra.mrb[0].mxu0 %v569
          %v651 = vpop.f32.mrb[0].mxu0
          %v652 = vadd.f32 0.0, %v651
          %v653 = vpop.f32.mrb[0].mxu0
          %v654 = vpop.f32.mrb[0].mxu0
          %v655 = vadd.f32 0.0, %v654
          %v656 = vpop.f32.mrb[0].mxu0
          %657 = vmatprep.mubr.bf16.mxu0 0
          %658 = vmatmul.mubr.bf16.gmra.mrb[0].mxu0 %v572
          %v659 = vpop.f32.mrb[0].mxu0
          %v660 = vadd.f32 0.0, %v659
          %v661 = vpop.f32.mrb[0].mxu0
          %v662 = vpop.f32.mrb[0].mxu0
          %v663 = vadd.f32 0.0, %v662
          %v664 = vpop.f32.mrb[0].mxu0
          %665 = vmatprep.mubr.bf16.mxu0 0
          %666 = vmatmul.mubr.bf16.gmra.mrb[0].mxu0 %v575
          %v667 = vpop.f32.mrb[0].mxu0
          %v668 = vadd.f32 0.0, %v667
          %v669 = vpop.f32.mrb[0].mxu0
          %v670 = vpop.f32.mrb[0].mxu0
          %v671 = vadd.f32 0.0, %v670
          %v672 = vpop.f32.mrb[0].mxu0
          %673 = vdwg.mxu0
          %674 = vst [vmem:[#allocation4] sm:$0xff] %v612
          %675 = vst [vmem:[#allocation4 + $0x8] sm:$0xff] %v615
          %676 = vst [vmem:[#allocation4 + $0x10] sm:$0xff] %v620
          %677 = vst [vmem:[#allocation4 + $0x18] sm:$0xff] %v623
          %678 = vst [vmem:[#allocation4 + $0x20] sm:$0xff] %v628
          %679 = vst [vmem:[#allocation4 + $0x28] sm:$0xff] %v631
          %680 = vst [vmem:[#allocation4 + $0x30] sm:$0xff] %v636
          %681 = vst [vmem:[#allocation4 + $0x38] sm:$0xff] %v639
          %682 = vst [vmem:[#allocation4 + $0x40] sm:$0xff] %v644
          %683 = vst [vmem:[#allocation4 + $0x48] sm:$0xff] %v647
          %684 = vst [vmem:[#allocation4 + $0x50] sm:$0xff] %v652
          %685 = vst [vmem:[#allocation4 + $0x58] sm:$0xff] %v655
          %686 = vst [vmem:[#allocation4 + $0x60] sm:$0xff] %v660
          %687 = vst [vmem:[#allocation4 + $0x68] sm:$0xff] %v663
          %688 = vst [vmem:[#allocation4 + $0x70] sm:$0xff] %v668
          %689 = vst [vmem:[#allocation4 + $0x78] sm:$0xff] %v671
        $region48: #{tpu_custom_call.1} parent=39 // pred_fallthru
          _
        // Predicated region
        $region49: #{tpu_custom_call.1} parent=39 // pred_check
          %p690 = pneg %p140
        $region50: #{tpu_custom_call.1} parent=39 // pred_check_branch
          %692 = sbr.rel (%p690) target = $region52
        $region51: #{tpu_custom_call.1} parent=39 // pred_region
          %s694 = ssub.s32 2048, 2048
          %695 = vsyncadd [#allocation5], %s694
          %s696 = sshll.u32 [#allocation4], 4
          %s697 = int_to_ptr.vmem [resolvable:$true] %s696
          %702 = dma.vmem_to_hbm [thread:$0]  %s697, 2048, %s5, [#allocation5], 128, 128, 8
        $region52: #{tpu_custom_call.1} parent=39 // pred_fallthru
          _
        // Predicated region
        $region53: #{tpu_custom_call.1} parent=39 // pred_check
          %p703 = pneg %p140
        $region54: #{tpu_custom_call.1} parent=39 // pred_check_branch
          %705 = sbr.rel (%p703) target = $region56
        $region55: #{tpu_custom_call.1} parent=39 // pred_region
          %706 = dma.done [#allocation5], 2048
        $region56: #{tpu_custom_call.1} parent=39 // pred_fallthru
          _
      $region40: #{tpu_custom_call.1} parent=5 // pred_fallthru
        _
      %p707 = scmp.le.s32.totalorder 2, %s12
      // Predicated region
      $region57: #{tpu_custom_call.1} parent=5 // pred_check
        %p708 = pneg %p707
      $region58: #{tpu_custom_call.1} parent=5 // pred_check_branch
        %710 = sbr.rel (%p708) target = $region60
      $region59: #{tpu_custom_call.1} parent=5 // pred_region
        %s711 = ssub.s32 %s12, 2
      $region60: #{tpu_custom_call.1} parent=5 // pred_fallthru
        _
    $region6: #{tpu_custom_call.1} parent=1 // loop_footer
      %s16 = sadd.s32 1, %s12
    $region7: #{tpu_custom_call.1} parent=1 // loop_footer_branch
      %11 = sbr.rel target = $region3
    $region8: #{tpu_custom_call.1} parent=1 // loop_exit
      _
    %712 = vsyncpa [#allocation5], 1
    %s713 = scalar_lea.sflag [#allocation5], 1
    %714 = vsyncpa %s713, 1

</llo_original>
